<compile_context>
chip_gen: v5e
topology: v5e:2x2
jax: 0.10.0
libtpu: 0.0.40
codegen_flags: <defaults>
</compile_context>

<pallas_src>
import functools

import jax
import jax.numpy as jnp
import numpy as np
from jax.experimental import pallas as pl
from jax.experimental.pallas import tpu as pltpu

LANES = 128
_INV_LN10 = float(1.0 / np.log(10.0))
_PSNR_FLOOR = 1e-30   # avoid -inf / NaN PSNR when the clamped MSE is exactly 0


# ----------------------------------------------------------------------------
# helpers
# ----------------------------------------------------------------------------
def _to_lane_dense_2d(x):
    """Reshape any tensor to a lane-dense (rows, 128) f32 slab.

    For element counts divisible by 128 (the common case here) this is a pure
    reshape (no data movement). Otherwise only the last partial row is padded
    with zeros, which contributes exactly 0 to every reduction used below
    (diff = 0 for MSE terms; mu = 0, logvar = 0 gives 1 + 0 - 0 - 1 = 0 for KL).
    """
    x = jnp.asarray(x, jnp.float32)
    n = int(np.prod(x.shape))
    if n % LANES == 0:
        return x.reshape(n // LANES, LANES), n
    pad = (-n) % LANES
    flat = jnp.pad(x.reshape(-1), (0, pad))
    return flat.reshape(-1, LANES), n


# ----------------------------------------------------------------------------
# Fused loss kernel: MSE, clamped-MSE, PSNR, KL in a single invocation.
# Full arrays are resident in VMEM (no grid, no pipelining) — the tensors in
# this model are a few thousand elements, far below VMEM capacity on every TPU
# generation, so a single-shot kernel removes all per-step pipeline overhead.
# ----------------------------------------------------------------------------
def _fused_loss_kernel(inv_n, inv_bs, x_ref, y_ref, mu_ref, lv_ref, out_ref):
    x = x_ref[...]
    y = y_ref[...]

    d = x - y
    dc = jnp.clip(x, 0.0, 1.0) - y           # torch.clamp(x_hat, 0, 1)
    mse = jnp.sum(d * d) * inv_n
    cmse = jnp.sum(dc * dc) * inv_n

    mu = mu_ref[...]
    lv = lv_ref[...]
    kl = -0.5 * jnp.sum(1.0 + lv - mu * mu - jnp.exp(lv)) * inv_bs

    out_ref[0, 0] = mse
    out_ref[0, 1] = cmse
    # Generate_PSNR: 20*log10(1.0) - 10*log10(mse) == -10*log10(mse)
    out_ref[0, 2] = -10.0 * jnp.log(jnp.maximum(cmse, _PSNR_FLOOR)) * _INV_LN10
    out_ref[0, 3] = kl


def fused_losses_pallas(x_hat, img, mu, logvar, batch_size):
    """Returns (mse, mse_clamped, psnr, kl) as f32 scalars."""
    x2d, n_img = _to_lane_dense_2d(x_hat)
    y2d, _ = _to_lane_dense_2d(img)
    mu2d, n_lat = _to_lane_dense_2d(mu)
    lv2d, _ = _to_lane_dense_2d(logvar)

    kernel = functools.partial(_fused_loss_kernel,
                               float(1.0 / n_img),
                               float(1.0 / batch_size))

    cost = pl.CostEstimate(
        flops=5 * n_img + 6 * n_lat,
        transcendentals=n_lat + 1,                       # exp(logvar) + log
        bytes_accessed=4 * (2 * n_img + 2 * n_lat) + 16,
    )

    out = pl.pallas_call(
        kernel,
        out_shape=jax.ShapeDtypeStruct((1, 4), jnp.float32),
        in_specs=[pl.BlockSpec(memory_space=pltpu.MemorySpace.VMEM)] * 4,
        out_specs=pl.BlockSpec(memory_space=pltpu.MemorySpace.SMEM),
        cost_estimate=cost,
    )(x2d, y2d, mu2d, lv2d)

    return out[0, 0], out[0, 1], out[0, 2], out[0, 3]


# ----------------------------------------------------------------------------
# kl_annealing (host-side, numpy) — identical schedule to the reference
# ----------------------------------------------------------------------------
class KLAnnealing:
    def __init__(self, num_epoch=10, kl_anneal_type="Monotonic",
                 kl_anneal_cycle=2, kl_anneal_ratio=1.0, current_epoch=0):
        self.current_epoch = current_epoch
        if kl_anneal_type == "Cyclical":
            self.beta = self._frange(num_epoch, 0.0, kl_anneal_ratio, kl_anneal_cycle)
        elif kl_anneal_type == "Monotonic":
            self.beta = self._frange(num_epoch, 0.0, kl_anneal_ratio, 1)
        else:  # WithoutKL
            self.beta = self._frange(num_epoch, 0.0, kl_anneal_ratio, 1, without_kl=True)

    @staticmethod
    def _frange(n_iter, start=0.0, stop=1.0, n_cycle=1, ratio=1, without_kl=False):
        L = np.ones(n_iter + 1) * stop
        if without_kl:
            return L
        period = n_iter / n_cycle
        step = (stop - start) / (period * ratio)
        for c in range(n_cycle):
            v, i = start, 0
            while v <= stop and int(i + c * period) < n_iter:
                L[int(i + c * period)] = v
                v += step
                i += 1
        return L

    def update(self):
        self.current_epoch += 1

    def get_beta(self):
        return self.beta[self.current_epoch]


# ----------------------------------------------------------------------------
# VAE_Model analogue: per-step loss computation on the fused Pallas kernel
# ----------------------------------------------------------------------------
class VAEModelPallas:
    def __init__(self, batch_size=2, num_epoch=10):
        self.batch_size = batch_size
        self.kl_annealing = KLAnnealing(num_epoch=num_epoch)
        # TODO(synk): frame/label encoders, Gaussian_Predictor, Decoder_Fusion
        # and Generator are external modules whose definitions were not given;
        # their parameters cannot be constructed here.

    def step_losses(self, x_hat, img_current, mu, logvar):
        mse, mse_clamped, psnr, kl = fused_losses_pallas(
            x_hat, img_current, mu, logvar, self.batch_size)
        beta = self.kl_annealing.get_beta()
        loss = mse + kl * beta           # training_one_step loss composition
        return {"mse": mse, "mse_clamped": mse_clamped, "psnr": psnr,
                "kl": kl, "loss": loss}


# ----------------------------------------------------------------------------
# pure-JAX reference (mirrors the PyTorch math)
# ----------------------------------------------------------------------------
def _ref(x_hat, img, mu, logvar, batch_size):
    d = x_hat - img
    mse = jnp.mean(d * d)
    dc = jnp.clip(x_hat, 0.0, 1.0) - img
    cmse = jnp.mean(dc * dc)
    psnr = -10.0 * jnp.log10(cmse)
    kl = -0.5 * jnp.sum(1.0 + logvar - mu ** 2 - jnp.exp(logvar)) / batch_size
    return mse, cmse, psnr, kl


if __name__ == "__main__":
    key = jax.random.PRNGKey(0)
    k1, k2, k3, k4 = jax.random.split(key, 4)

    B, C, H, W = 2, 3, 16, 16        # frames (NCHW, like PyTorch)
    N_dim = 12                       # latent channel dim of Gaussian_Predictor

    x_hat = jax.random.uniform(k1, (B, C, H, W), jnp.float32) * 1.4 - 0.2
    img = jax.random.uniform(k2, (B, C, H, W), jnp.float32)
    mu = jax.random.normal(k3, (B, N_dim, H, W), jnp.float32) * 0.1
    logvar = jax.random.normal(k4, (B, N_dim, H, W), jnp.float32) * 0.1

    model = VAEModelPallas(batch_size=B, num_epoch=10)
    out = model.step_losses(x_hat, img, mu, logvar)
    out = jax.tree_util.tree_map(jax.block_until_ready, out)

    mse_r, cmse_r, psnr_r, kl_r = _ref(x_hat, img, mu, logvar, B)
    assert np.allclose(out["mse"], mse_r, rtol=1e-3, atol=1e-4)
    assert np.allclose(out["mse_clamped"], cmse_r, rtol=1e-3, atol=1e-4)
    assert np.allclose(out["psnr"], psnr_r, rtol=1e-3, atol=1e-3)
    assert np.allclose(out["kl"], kl_r, rtol=1e-3, atol=1e-3)

    print("KERNEL_OK")
</pallas_src>

<mosaic_0001>
module attributes {stable_mosaic.version = 11 : i64} {
  func.func @_fused_loss_kernel(%arg0: memref<12x128xf32, #tpu.memory_space<vmem>>, %arg1: memref<12x128xf32, #tpu.memory_space<vmem>>, %arg2: memref<48x128xf32, #tpu.memory_space<vmem>>, %arg3: memref<48x128xf32, #tpu.memory_space<vmem>>, %arg4: memref<1x4xf32, #tpu.memory_space<smem>>) attributes {dimension_semantics = [], scalar_prefetch = 0 : i64, scratch_operands = 0 : i64, tpu.core_type = #tpu.core_type<tc>} {
    %c0 = arith.constant 0 : index
    %c0_0 = arith.constant 0 : index
    %0 = vector.load %arg0[%c0, %c0_0] : memref<12x128xf32, #tpu.memory_space<vmem>>, vector<12x128xf32>
    %c0_1 = arith.constant 0 : index
    %c0_2 = arith.constant 0 : index
    %1 = vector.load %arg1[%c0_1, %c0_2] : memref<12x128xf32, #tpu.memory_space<vmem>>, vector<12x128xf32>
    %2 = arith.subf %0, %1 : vector<12x128xf32>
    %cst = arith.constant 0.000000e+00 : f32
    %cst_3 = arith.constant 1.000000e+00 : f32
    %3 = vector.broadcast %cst : f32 to vector<12x128xf32>
    %4 = arith.maximumf %3, %0 : vector<12x128xf32>
    %5 = vector.broadcast %cst_3 : f32 to vector<12x128xf32>
    %6 = arith.minimumf %5, %4 : vector<12x128xf32>
    %7 = arith.subf %6, %1 : vector<12x128xf32>
    %8 = arith.mulf %2, %2 : vector<12x128xf32>
    %9 = vector.shape_cast %8 : vector<12x128xf32> to vector<1x12x128xf32>
    %cst_4 = arith.constant dense<0.000000e+00> : vector<1xf32>
    %10 = vector.multi_reduction <add>, %9, %cst_4 [1, 2] : vector<1x12x128xf32> to vector<1xf32>
    %11 = vector.shape_cast %10 : vector<1xf32> to vector<1x1x1xf32>
    %12 = vector.extract %11[0, 0, 0] : f32 from vector<1x1x1xf32>
    %cst_5 = arith.constant 6.51041686E-4 : f32
    %13 = arith.mulf %12, %cst_5 : f32
    %14 = arith.mulf %7, %7 : vector<12x128xf32>
    %15 = vector.shape_cast %14 : vector<12x128xf32> to vector<1x12x128xf32>
    %cst_6 = arith.constant dense<0.000000e+00> : vector<1xf32>
    %16 = vector.multi_reduction <add>, %15, %cst_6 [1, 2] : vector<1x12x128xf32> to vector<1xf32>
    %17 = vector.shape_cast %16 : vector<1xf32> to vector<1x1x1xf32>
    %18 = vector.extract %17[0, 0, 0] : f32 from vector<1x1x1xf32>
    %cst_7 = arith.constant 6.51041686E-4 : f32
    %19 = arith.mulf %18, %cst_7 : f32
    %c0_8 = arith.constant 0 : index
    %c0_9 = arith.constant 0 : index
    %20 = vector.load %arg2[%c0_8, %c0_9] : memref<48x128xf32, #tpu.memory_space<vmem>>, vector<48x128xf32>
    %c0_10 = arith.constant 0 : index
    %c0_11 = arith.constant 0 : index
    %21 = vector.load %arg3[%c0_10, %c0_11] : memref<48x128xf32, #tpu.memory_space<vmem>>, vector<48x128xf32>
    %cst_12 = arith.constant 1.000000e+00 : f32
    %22 = vector.broadcast %cst_12 : f32 to vector<48x128xf32>
    %23 = arith.addf %22, %21 : vector<48x128xf32>
    %24 = arith.mulf %20, %20 : vector<48x128xf32>
    %25 = arith.subf %23, %24 : vector<48x128xf32>
    %26 = math.exp %21 : vector<48x128xf32>
    %27 = arith.subf %25, %26 : vector<48x128xf32>
    %28 = vector.shape_cast %27 : vector<48x128xf32> to vector<1x48x128xf32>
    %cst_13 = arith.constant dense<0.000000e+00> : vector<1xf32>
    %29 = vector.multi_reduction <add>, %28, %cst_13 [1, 2] : vector<1x48x128xf32> to vector<1xf32>
    %30 = vector.shape_cast %29 : vector<1xf32> to vector<1x1x1xf32>
    %31 = vector.extract %30[0, 0, 0] : f32 from vector<1x1x1xf32>
    %cst_14 = arith.constant -5.000000e-01 : f32
    %32 = arith.mulf %cst_14, %31 : f32
    %cst_15 = arith.constant 5.000000e-01 : f32
    %33 = arith.mulf %32, %cst_15 : f32
    %c0_16 = arith.constant 0 : index
    %c0_17 = arith.constant 0 : index
    %34 = memref.load %arg4[%c0_16, %c0_17] : memref<1x4xf32, #tpu.memory_space<smem>>
    memref.store %13, %arg4[%c0_16, %c0_17] : memref<1x4xf32, #tpu.memory_space<smem>>
    %c0_18 = arith.constant 0 : index
    %c1 = arith.constant 1 : index
    %35 = memref.load %arg4[%c0_18, %c1] : memref<1x4xf32, #tpu.memory_space<smem>>
    memref.store %19, %arg4[%c0_18, %c1] : memref<1x4xf32, #tpu.memory_space<smem>>
    %cst_19 = arith.constant 1.000000e-30 : f32
    %36 = arith.maximumf %19, %cst_19 : f32
    %37 = math.log %36 : f32
    %cst_20 = arith.constant -1.000000e+01 : f32
    %38 = arith.mulf %cst_20, %37 : f32
    %cst_21 = arith.constant 0.434294492 : f32
    %39 = arith.mulf %38, %cst_21 : f32
    %c0_22 = arith.constant 0 : index
    %c2 = arith.constant 2 : index
    %40 = memref.load %arg4[%c0_22, %c2] : memref<1x4xf32, #tpu.memory_space<smem>>
    memref.store %39, %arg4[%c0_22, %c2] : memref<1x4xf32, #tpu.memory_space<smem>>
    %c0_23 = arith.constant 0 : index
    %c3 = arith.constant 3 : index
    %41 = memref.load %arg4[%c0_23, %c3] : memref<1x4xf32, #tpu.memory_space<smem>>
    memref.store %33, %arg4[%c0_23, %c3] : memref<1x4xf32, #tpu.memory_space<smem>>
    return
  }
}

</mosaic_0001>

<llo_original>
// kernel: tpu_custom_call.1
$region0: #{tpu_custom_call.1}
  #allocation0 [shape = 'u32[]', space=smem, size = 0x4, offset = 0x4, fixed_abs, tag = 'smem constant byte address 0x4 - core index']
  #allocation1 [shape = 'u32[72,128]{1,0:T(1,128)}', space=vmem, size = 0x9000, scoped, tag = 'internal scratch']
  %s0 = inlined_call_operand.hbm [shape: f32[12,128], index: 0, kind: input, shape index: {}]
  %s1 = inlined_call_operand.hbm [shape: f32[12,128], index: 1, kind: input, shape index: {}]
  %s2 = inlined_call_operand.hbm [shape: f32[48,128], index: 2, kind: input, shape index: {}]
  %s3 = inlined_call_operand.hbm [shape: f32[48,128], index: 3, kind: input, shape index: {}]
  %s4 = inlined_call_operand.hbm [shape: f32[1,4], index: 4, kind: output, shape index: {}]
  %s5 = sld [smem:[#allocation0]]
  $region42: #{tpu_custom_call.1} parent=0
    _
  %s7 = ssub.s32 1, %s5
  %s8 = scalar_select 0, %s7, %s5
  $region1: #{tpu_custom_call.1} parent=0
    #allocation2 [shape = 'u8[8192]{0}', space=vmem, size = 0x2000, scoped, tag = 'input window, operand 0, single buffered']
    #allocation3 [shape = 's32[1]{0}', space=sflag, size = 0x4, scoped, tag = 'scoped memory for tpu_custom_call.1']
    #allocation4 [shape = 's32[1]{0}', space=sflag, size = 0x4, scoped, tag = 'scoped memory for tpu_custom_call.1']
    #allocation5 [shape = 'u8[8192]{0}', space=vmem, size = 0x2000, scoped, tag = 'input window, operand 1, single buffered']
    #allocation6 [shape = 's32[1]{0}', space=sflag, size = 0x4, scoped, tag = 'scoped memory for tpu_custom_call.1']
    #allocation7 [shape = 'u8[24576]{0}', space=vmem, size = 0x6000, scoped, tag = 'input window, operand 2, single buffered']
    #allocation8 [shape = 'u8[24576]{0}', space=vmem, size = 0x6000, scoped, tag = 'input window, operand 3, single buffered']
    #allocation9 [shape = 's32[1]{0}', space=sflag, size = 0x4, scoped, tag = 'scoped memory for tpu_custom_call.1']
    #allocation10 [shape = 'u8[512]{0}', space=smem, size = 0x200, scoped, tag = 'output window, operand 0, single buffered']
    %9 = vsyncpa [#allocation3], 0
    %10 = vsyncpa [#allocation6], 0
    %11 = vsyncpa [#allocation9], 0
    %12 = vsyncpa [#allocation4], 0
    // Predicated region
    $region2: #{tpu_custom_call.1} parent=1 // pred_check
      _
    $region3: #{tpu_custom_call.1} parent=1 // pred_check_branch
      %14 = sbr.rel (0) target = $region5
    $region4: #{tpu_custom_call.1} parent=1 // pred_region
      %16 = vsyncadd [#allocation3], 0
      %s17 = sshll.u32 %s0, 4
      %s18 = int_to_ptr.hbm [resolvable:$true] %s17
      %s19 = sshll.u32 [#allocation2], 4
      %s20 = int_to_ptr.vmem [resolvable:$true] %s19
      %25 = dma.hbm_to_vmem [thread:$0]  %s18, 256, %s20, [#allocation3], 128, 128, 8
    $region5: #{tpu_custom_call.1} parent=1 // pred_fallthru
      _
    // Predicated region
    $region6: #{tpu_custom_call.1} parent=1 // pred_check
      _
    $region7: #{tpu_custom_call.1} parent=1 // pred_check_branch
      %27 = sbr.rel (0) target = $region9
    $region8: #{tpu_custom_call.1} parent=1 // pred_region
      %29 = vsyncadd [#allocation6], 0
      %s30 = sshll.u32 %s1, 4
      %s31 = int_to_ptr.hbm [resolvable:$true] %s30
      %s32 = sshll.u32 [#allocation5], 4
      %s33 = int_to_ptr.vmem [resolvable:$true] %s32
      %38 = dma.hbm_to_vmem [thread:$0]  %s31, 256, %s33, [#allocation6], 128, 128, 8
    $region9: #{tpu_custom_call.1} parent=1 // pred_fallthru
      _
    // Predicated region
    $region10: #{tpu_custom_call.1} parent=1 // pred_check
      _
    $region11: #{tpu_custom_call.1} parent=1 // pred_check_branch
      %40 = sbr.rel (0) target = $region13
    $region12: #{tpu_custom_call.1} parent=1 // pred_region
      %42 = vsyncadd [#allocation6], 0
      %s43 = sshll.u32 %s2, 4
      %s44 = int_to_ptr.hbm [resolvable:$true] %s43
      %s45 = sshll.u32 [#allocation7], 4
      %s46 = int_to_ptr.vmem [resolvable:$true] %s45
      %51 = dma.hbm_to_vmem [thread:$0]  %s44, 768, %s46, [#allocation6], 128, 128, 8
    $region13: #{tpu_custom_call.1} parent=1 // pred_fallthru
      _
    // Predicated region
    $region14: #{tpu_custom_call.1} parent=1 // pred_check
      _
    $region15: #{tpu_custom_call.1} parent=1 // pred_check_branch
      %53 = sbr.rel (0) target = $region17
    $region16: #{tpu_custom_call.1} parent=1 // pred_region
      %55 = vsyncadd [#allocation9], 0
      %s56 = sshll.u32 %s3, 4
      %s57 = int_to_ptr.hbm [resolvable:$true] %s56
      %s58 = sshll.u32 [#allocation8], 4
      %s59 = int_to_ptr.vmem [resolvable:$true] %s58
      %64 = dma.hbm_to_vmem [thread:$0]  %s57, 768, %s59, [#allocation9], 128, 128, 8
    $region17: #{tpu_custom_call.1} parent=1 // pred_fallthru
      _
    // Predicated region
    $region18: #{tpu_custom_call.1} parent=1 // pred_check
      _
    $region19: #{tpu_custom_call.1} parent=1 // pred_check_branch
      %66 = sbr.rel (0) target = $region21
    $region20: #{tpu_custom_call.1} parent=1 // pred_region
      %68 = dma.done [#allocation3], 256
    $region21: #{tpu_custom_call.1} parent=1 // pred_fallthru
      _
    // Predicated region
    $region22: #{tpu_custom_call.1} parent=1 // pred_check
      _
    $region23: #{tpu_custom_call.1} parent=1 // pred_check_branch
      %70 = sbr.rel (0) target = $region25
    $region24: #{tpu_custom_call.1} parent=1 // pred_region
      %72 = dma.done [#allocation6], 256
    $region25: #{tpu_custom_call.1} parent=1 // pred_fallthru
      _
    // Predicated region
    $region26: #{tpu_custom_call.1} parent=1 // pred_check
      _
    $region27: #{tpu_custom_call.1} parent=1 // pred_check_branch
      %74 = sbr.rel (0) target = $region29
    $region28: #{tpu_custom_call.1} parent=1 // pred_region
      %76 = dma.done [#allocation6], 768
    $region29: #{tpu_custom_call.1} parent=1 // pred_fallthru
      _
    // Predicated region
    $region30: #{tpu_custom_call.1} parent=1 // pred_check
      _
    $region31: #{tpu_custom_call.1} parent=1 // pred_check_branch
      %78 = sbr.rel (0) target = $region33
    $region32: #{tpu_custom_call.1} parent=1 // pred_region
      %80 = dma.done [#allocation9], 768
    $region33: #{tpu_custom_call.1} parent=1 // pred_fallthru
      _
    %v81 = vld [vmem:[#allocation2] sm:$0xff]
    %v82 = vld [vmem:[#allocation2 + $0x8] sm:$0xf]
    %v83 = vld [vmem:[#allocation5] sm:$0xff]
    %v84 = vld [vmem:[#allocation5 + $0x8] sm:$0xf]
    %v85 = vsub.f32 %v81, %v83
    %v86 = vsub.f32 %v82, %v84
    %v87 = vmax.f32 %v81, 0.0
    %v88 = vmax.f32 %v82, 0.0
    %v89 = vmin.f32 %v87, 1.0
    %v90 = vmin.f32 %v88, 1.0
    %v91 = vsub.f32 %v89, %v83
    %v92 = vsub.f32 %v90, %v84
    %v93 = vmul.f32 %v85, %v85
    %v94 = vmul.f32 %v86, %v86
    %vm95 = vcmask 1043456
    %v96 = vsel %vm95, %v94, 0.0
    %v97 = vadd.f32 %v93, %v96
    %98 = vadd.xlane.f32.xlu0 %v97
    %v99 = vpop.xlane.xlu0 %98
    %v100 = vrot.slane %v99, 4
    %v101 = vadd.f32 %v99, %v100
    %v102 = vrot.slane %v101, 2
    %v103 = vadd.f32 %v101, %v102
    %v104 = vrot.slane %v103, 1
    %v105 = vadd.f32 %v103, %v104
    %s106 = vtos %v105
    %s107 = smul.f32 %s106, 0.0006510417
    %v108 = vmul.f32 %v91, %v91
    %v109 = vmul.f32 %v92, %v92
    %v110 = vsel %vm95, %v109, 0.0
    %v111 = vadd.f32 %v108, %v110
    %112 = vadd.xlane.f32.xlu0 %v111
    %v113 = vpop.xlane.xlu0 %112
    %v114 = vrot.slane %v113, 4
    %v115 = vadd.f32 %v113, %v114
    %v116 = vrot.slane %v115, 2
    %v117 = vadd.f32 %v115, %v116
    %v118 = vrot.slane %v117, 1
    %v119 = vadd.f32 %v117, %v118
    %s120 = vtos %v119
    %s121 = smul.f32 %s120, 0.0006510417
    %v122 = vld [vmem:[#allocation7] sm:$0xff]
    %v123 = vld [vmem:[#allocation7 + $0x8] sm:$0xff]
    %v124 = vld [vmem:[#allocation7 + $0x10] sm:$0xff]
    %v125 = vld [vmem:[#allocation7 + $0x18] sm:$0xff]
    %v126 = vld [vmem:[#allocation7 + $0x20] sm:$0xff]
    %v127 = vld [vmem:[#allocation7 + $0x28] sm:$0xff]
    %v128 = vld [vmem:[#allocation8] sm:$0xff]
    %v129 = vld [vmem:[#allocation8 + $0x8] sm:$0xff]
    %v130 = vld [vmem:[#allocation8 + $0x10] sm:$0xff]
    %v131 = vld [vmem:[#allocation8 + $0x18] sm:$0xff]
    %v132 = vld [vmem:[#allocation8 + $0x20] sm:$0xff]
    %v133 = vld [vmem:[#allocation8 + $0x28] sm:$0xff]
    %v134 = vadd.f32 %v128, 1.0
    %v135 = vadd.f32 %v129, 1.0
    %v136 = vadd.f32 %v130, 1.0
    %v137 = vadd.f32 %v131, 1.0
    %v138 = vadd.f32 %v132, 1.0
    %v139 = vadd.f32 %v133, 1.0
    %v140 = vmul.f32 %v122, %v122
    %v141 = vmul.f32 %v123, %v123
    %v142 = vmul.f32 %v124, %v124
    %v143 = vmul.f32 %v125, %v125
    %v144 = vmul.f32 %v126, %v126
    %v145 = vmul.f32 %v127, %v127
    %v146 = vsub.f32 %v134, %v140
    %v147 = vsub.f32 %v135, %v141
    %v148 = vsub.f32 %v136, %v142
    %v149 = vsub.f32 %v137, %v143
    %v150 = vsub.f32 %v138, %v144
    %v151 = vsub.f32 %v139, %v145
    %v152 = vmul.f32 %v128, 1.442695
    %v153 = vpow.pop %v152
    %v154 = vmul.f32 %v129, 1.442695
    %v155 = vpow.pop %v154
    %v156 = vmul.f32 %v130, 1.442695
    %v157 = vpow.pop %v156
    %v158 = vmul.f32 %v131, 1.442695
    %v159 = vpow.pop %v158
    %v160 = vmul.f32 %v132, 1.442695
    %v161 = vpow.pop %v160
    %v162 = vmul.f32 %v133, 1.442695
    %v163 = vpow.pop %v162
    %v164 = vsub.f32 %v146, %v153
    %v165 = vsub.f32 %v147, %v155
    %v166 = vsub.f32 %v148, %v157
    %v167 = vsub.f32 %v149, %v159
    %v168 = vsub.f32 %v150, %v161
    %v169 = vsub.f32 %v151, %v163
    %v170 = vadd.f32 %v164, %v165
    %v171 = vadd.f32 %v170, %v166
    %v172 = vadd.f32 %v171, %v167
    %v173 = vadd.f32 %v172, %v168
    %v174 = vadd.f32 %v173, %v169
    %175 = vadd.xlane.f32.xlu0 %v174
    %v176 = vpop.xlane.xlu0 %175
    %v177 = vrot.slane %v176, 4
    %v178 = vadd.f32 %v176, %v177
    %v179 = vrot.slane %v178, 2
    %v180 = vadd.f32 %v178, %v179
    %v181 = vrot.slane %v180, 1
    %v182 = vadd.f32 %v180, %v181
    %s183 = vtos %v182
    %s184 = smul.f32 %s183, -0.5
    %s185 = smul.f32 %s184, 0.5
    %s186 = scalar_lea.smem [#allocation10], 0
    %187 = sst [smem:[%s186]] %s107
    %s188 = scalar_lea.smem [#allocation10], 1
    %189 = sst [smem:[%s188]] %s121
    %s190 = smax.f32 %s121, 1e-30
    %v191 = vstv %s190
    %v192 = vlog2.pop %v191
    %v193 = vmul.f32 %v192, 0.6931472
    %s194 = vtos %v193
    %s195 = smul.f32 %s194, -10.0
    %s196 = smul.f32 %s195, 0.4342945
    %s197 = scalar_lea.smem [#allocation10], 2
    %198 = sst [smem:[%s197]] %s196
    %s199 = scalar_lea.smem [#allocation10], 3
    %200 = sst [smem:[%s199]] %s185
    // Predicated region
    $region34: #{tpu_custom_call.1} parent=1 // pred_check
      _
    $region35: #{tpu_custom_call.1} parent=1 // pred_check_branch
      %202 = sbr.rel (0) target = $region37
    $region36: #{tpu_custom_call.1} parent=1 // pred_region
      %204 = vsyncadd [#allocation4], 0
      %s206 = sshll.u32 %s4, 4
      %s207 = int_to_ptr.hbm [resolvable:$true] %s206
      %209 = dma.smem_to_hbm [#allocation10], 16, %s207, [#allocation4]
    $region37: #{tpu_custom_call.1} parent=1 // pred_fallthru
      _
    // Predicated region
    $region38: #{tpu_custom_call.1} parent=1 // pred_check
      _
    $region39: #{tpu_custom_call.1} parent=1 // pred_check_branch
      %211 = sbr.rel (0) target = $region41
    $region40: #{tpu_custom_call.1} parent=1 // pred_region
      %213 = dma.done [#allocation4], 16
    $region41: #{tpu_custom_call.1} parent=1 // pred_fallthru
      _
    %214 = sfence
    %215 = vsyncpa [#allocation3], 1
    %216 = vsyncpa [#allocation6], 1
    %217 = vsyncpa [#allocation9], 1
    %218 = vsyncpa [#allocation4], 1

</llo_original>
